<compile_context>
chip_gen: v6e
topology: v6e:2x2x1
jax: 0.10.0
libtpu: 0.0.40
codegen_flags: <defaults>
</compile_context>

<pallas_src>
import numpy as np
import jax
import jax.numpy as jnp
from jax.experimental import pallas as pl
from jax.experimental.pallas import tpu as pltpu


def make_pe_table(d_model: int, max_len: int = 5000, dtype=jnp.float32) -> jnp.ndarray:
    """Deterministic sinusoidal PE table, identical to the PyTorch __init__."""
    assert d_model % 2 == 0, "d_model must be even (same constraint as the PyTorch module)"
    pe = np.zeros((max_len, d_model), dtype=np.float32)
    position = np.arange(0, max_len, dtype=np.float32)[:, None]            # (max_len, 1)
    div_term = np.exp(
        np.arange(0, d_model, 2, dtype=np.float32) * (-np.log(10000.0) / d_model)
    )                                                                       # (d_model/2,)
    pe[:, 0::2] = np.sin(position * div_term)
    pe[:, 1::2] = np.cos(position * div_term)
    return jnp.asarray(pe, dtype=dtype)                                     # (max_len, d_model)


def _add_kernel(x_ref, pe_ref, o_ref):
    # Single VPU add per vreg.  The PE block broadcasts over x's leading
    # (batch) block dim when their leading dims differ (1 vs tB); the leading
    # dim is neither lane nor sublane, so the broadcast is just vreg reuse.
    o_ref[...] = x_ref[...] + pe_ref[...]


def _sublane(dtype) -> int:
    # Sublane packing: 8 for 4-byte dtypes, 16 for bf16, 32 for int8/fp8.
    return max(8, 32 // jnp.dtype(dtype).itemsize)


def _pick_block(n: int, cap: int, align: int) -> int:
    """Largest block size <= ~cap that is `align`-aligned (or the full extent),
    preferring a size that divides n so the final block is not ragged
    (ragged blocks -> masked vst.msk partial stores)."""
    cap = min(cap, n)
    if cap == n:
        return n
    aligned = max(align, (cap // align) * align)
    if aligned >= n:
        return n
    best = None
    i = 1
    while i * i <= n:
        if n % i == 0:
            for d in (i, n // i):
                if d <= aligned and d % align == 0 and (best is None or d > best):
                    best = d
        i += 1
    # Only take the divisor if it doesn't shrink the block by more than 2x.
    if best is not None and best * 2 >= aligned:
        return best
    return aligned


def _vmem_budget():
    """Generation-aware (target_block_bytes, vmem_limit_bytes)."""
    phys = 128 << 20
    try:
        info = pltpu.get_tpu_info()
        phys = int(getattr(info, "vmem_capacity_bytes", phys))
    except Exception:
        pass
    if phys <= (64 << 20):
        # v7x-class: 64 MiB physical VMEM per TensorCore, very fast HBM ->
        # larger blocks to amortize per-step cost, but keep ~20 MiB headroom.
        return 6 << 20, 44 << 20
    # v5e / v6e: 128 MiB physical VMEM -> the default scoped limit is the
    # only constraint; go bigger.
    return 8 << 20, 64 << 20


def _limit_for(block_bytes: int, pe_bytes: int, base_limit: int) -> int:
    # x + out double-buffered, PE block (at most) double-buffered, + slack.
    needed = 4 * block_bytes + 2 * pe_bytes + (1 << 20)
    return max(base_limit, needed)


def positional_encoding(x: jnp.ndarray,
                        pe_table: jnp.ndarray,
                        *,
                        donate_x: bool = False,
                        target_block_bytes: int | None = None,
                        vmem_limit_bytes: int | None = None) -> jnp.ndarray:
    """x: (B, S, D); pe_table: (max_len, D). Returns x + pe[:S] broadcast over B.

    donate_x=True adds input_output_aliases={0: 0} (only safe if the caller
    does not reuse x afterwards)."""
    B, S, D = x.shape
    max_len, d_model = pe_table.shape
    assert S <= max_len, f"sequence length {S} exceeds max_len {max_len}"
    assert D == d_model, f"d_model mismatch: x has {D}, pe table has {d_model}"

    dtype = x.dtype
    itemsize = jnp.dtype(dtype).itemsize
    default_target, default_limit = _vmem_budget()
    target = target_block_bytes if target_block_bytes is not None else default_target
    base_limit = vmem_limit_bytes if vmem_limit_bytes is not None else default_limit
    io_alias = {0: 0} if donate_x else {}

    # Rank-match the PE operand to x so every kernel body is a plain add
    # (no per-step [None, :, :] broadcast/relayout inside the kernel).
    # Note: cast to x.dtype (see precision note at top of file).
    pe_slice = pe_table[:S, :].astype(dtype).reshape(1, S, D)               # (1, S, D)

    if D % 128 == 0:
        sub = _sublane(dtype)
        seq_bytes = S * D * itemsize

        if seq_bytes <= target:
            # ---- Batch-folded path: whole sequence fits one block. ----
            tB = _pick_block(B, max(1, target // seq_bytes), 1)
            # Megacore: if everything would land in a single grid step but the
            # copy is big enough to be worth splitting, use >= 2 steps so both
            # v7x TensorCores get work.
            if tB == B and B >= 2 and B * seq_bytes > (2 << 20):
                tB = (B + 1) // 2
            grid = (pl.cdiv(B, tB),)
            return pl.pallas_call(
                _add_kernel,
                out_shape=jax.ShapeDtypeStruct((B, S, D), dtype),
                grid=grid,
                in_specs=[
                    pl.BlockSpec((tB, S, D), lambda b: (b, 0, 0)),       # x
                    pl.BlockSpec((1, S, D), lambda b: (0, 0, 0)),        # pe: constant block
                ],
                out_specs=pl.BlockSpec((tB, S, D), lambda b: (b, 0, 0)),
                input_output_aliases=io_alias,
                compiler_params=pltpu.CompilerParams(
                    dimension_semantics=("parallel",),
                    vmem_limit_bytes=_limit_for(tB * seq_bytes, seq_bytes, base_limit),
                ),
            )(x, pe_slice)

        # ---- Long-sequence path: tile S, batch as inner grid axis. ----
        row_bytes = D * itemsize
        cap = max(sub, (target // row_bytes) // sub * sub)
        tS = _pick_block(S, min(cap, S), sub)
        num_s = pl.cdiv(S, tS)
        block_bytes = tS * row_bytes
        return pl.pallas_call(
            _add_kernel,
            out_shape=jax.ShapeDtypeStruct((B, S, D), dtype),
            # B innermost -> pe's block index (0, s, 0) is constant across it,
            # so the PE tile is revisited, not re-DMA'd per batch row.
            grid=(num_s, B),
            in_specs=[
                pl.BlockSpec((1, tS, D), lambda s, b: (b, s, 0)),        # x
                pl.BlockSpec((1, tS, D), lambda s, b: (0, s, 0)),        # pe (reused over b)
            ],
            out_specs=pl.BlockSpec((1, tS, D), lambda s, b: (b, s, 0)),
            input_output_aliases=io_alias,
            compiler_params=pltpu.CompilerParams(
                dimension_semantics=("parallel", "parallel"),
                vmem_limit_bytes=_limit_for(block_bytes, block_bytes, base_limit),
            ),
        )(x, pe_slice)

    # ---- Fallback for non-lane-aligned D (e.g. D=32 demo). ----
    # Flatten so the last dim is as lane-dense as possible, and block over the
    # batch so VMEM stays bounded (double-buffered streaming) at large B*S*D.
    F = S * D
    x2 = x.reshape(B, F)
    pe2 = pe_slice.reshape(1, F)
    row_bytes = F * itemsize
    # Batch is the sublane (second-to-last) dim here -> keep it sublane-aligned
    # whenever the block is not the full batch extent.
    tB = _pick_block(B, max(1, target // row_bytes), _sublane(dtype))
    grid = (pl.cdiv(B, tB),)
    out = pl.pallas_call(
        _add_kernel,
        out_shape=jax.ShapeDtypeStruct((B, F), dtype),
        grid=grid,
        in_specs=[
            pl.BlockSpec((tB, F), lambda b: (b, 0)),                     # x
            pl.BlockSpec((1, F), lambda b: (0, 0)),                      # pe: constant block
        ],
        out_specs=pl.BlockSpec((tB, F), lambda b: (b, 0)),
        input_output_aliases=io_alias,
        compiler_params=pltpu.CompilerParams(
            dimension_semantics=("parallel",),
            vmem_limit_bytes=_limit_for(tB * row_bytes, row_bytes, base_limit),
        ),
    )(x2, pe2)
    return out.reshape(B, S, D)


if __name__ == "__main__":
    key = jax.random.PRNGKey(0)

    # 1) Small demo shape (batch, seq, d_model) — exercises the flat fallback
    #    (D=32 is not lane-aligned).
    B, S, D = 2, 8, 32
    x = jax.random.normal(key, (B, S, D), dtype=jnp.float32)
    pe_table = make_pe_table(d_model=D, max_len=5000)
    out = jax.block_until_ready(positional_encoding(x, pe_table))
    ref = x + pe_table[None, :S, :]
    np.testing.assert_allclose(np.asarray(out), np.asarray(ref), rtol=1e-6, atol=1e-6)

    # 2) Lane-dense shape — batch-folded single-axis-grid (production) path.
    B2, S2, D2 = 2, 64, 128
    x2 = jax.random.normal(jax.random.fold_in(key, 1), (B2, S2, D2), dtype=jnp.float32)
    pe_table2 = make_pe_table(d_model=D2, max_len=5000)
    out2 = jax.block_until_ready(positional_encoding(x2, pe_table2))
    ref2 = x2 + pe_table2[None, :S2, :]
    np.testing.assert_allclose(np.asarray(out2), np.asarray(ref2), rtol=1e-6, atol=1e-6)

    # 3) Force the long-sequence tiled path (grid=(num_s, B), PE tile reused
    #    across the inner batch axis) via a tiny block-budget override so the
    #    test stays small: tS=8, num_s=8.
    out3 = jax.block_until_ready(
        positional_encoding(x2, pe_table2, target_block_bytes=8 * D2 * 4))
    np.testing.assert_allclose(np.asarray(out3), np.asarray(ref2), rtol=1e-6, atol=1e-6)

    # 4) bf16 lane-dense case (kernel adds in bf16; PyTorch would promote to
    #    fp32 — difference is ~1 ulp of bf16, documented above).
    B4, S4, D4 = 2, 16, 128
    x4 = jax.random.normal(jax.random.fold_in(key, 2), (B4, S4, D4), dtype=jnp.bfloat16)
    pe_table4 = make_pe_table(d_model=D4, max_len=5000)
    out4 = jax.block_until_ready(positional_encoding(x4, pe_table4))
    ref4 = x4 + pe_table4[None, :S4, :].astype(jnp.bfloat16)
    np.testing.assert_allclose(np.asarray(out4, dtype=np.float32),
                               np.asarray(ref4, dtype=np.float32), rtol=2e-2, atol=2e-2)

    print("KERNEL_OK")
</pallas_src>

<mosaic_0001>
module attributes {stable_mosaic.version = 11 : i64} {
  func.func @_add_kernel(%arg0: i32, %arg1: memref<2x256xf32, #tpu.memory_space<vmem>>, %arg2: memref<1x256xf32, #tpu.memory_space<vmem>>, %arg3: memref<2x256xf32, #tpu.memory_space<vmem>>) attributes {dimension_semantics = [#tpu.dimension_semantics<parallel>], iteration_bounds = array<i64: 1>, scalar_prefetch = 0 : i64, scratch_operands = 0 : i64, tpu.core_type = #tpu.core_type<tc>, window_params = [{transform_indices = @transform_0, window_bounds = array<i64: 2, 256>}, {pipeline_mode = #tpu.pipeline_mode<synchronous>, transform_indices = @transform_1, window_bounds = array<i64: 1, 256>}, {transform_indices = @transform_2, window_bounds = array<i64: 2, 256>}]} {
    %c0 = arith.constant 0 : index
    %c0_0 = arith.constant 0 : index
    %0 = vector.load %arg1[%c0, %c0_0] : memref<2x256xf32, #tpu.memory_space<vmem>>, vector<2x256xf32>
    %c0_1 = arith.constant 0 : index
    %c0_2 = arith.constant 0 : index
    %1 = vector.load %arg2[%c0_1, %c0_2] : memref<1x256xf32, #tpu.memory_space<vmem>>, vector<1x256xf32>
    %2 = vector.broadcast %1 : vector<1x256xf32> to vector<2x256xf32>
    %3 = arith.addf %0, %2 : vector<2x256xf32>
    %c0_3 = arith.constant 0 : index
    %c0_4 = arith.constant 0 : index
    %4 = vector.load %arg3[%c0_3, %c0_4] : memref<2x256xf32, #tpu.memory_space<vmem>>, vector<2x256xf32>
    tpu.vector_store %arg3[%c0_3, %c0_4], %3 {strides = array<i32>} : memref<2x256xf32, #tpu.memory_space<vmem>>, vector<2x256xf32>,
    return
  }
  func.func @transform_0(%arg0: i32) -> (i32, i32) {
    %c0_i32 = arith.constant 0 : i32
    %c0_i32_0 = arith.constant 0 : i32
    return %arg0, %c0_i32 : i32, i32
  }
  func.func @transform_1(%arg0: i32) -> (i32, i32) {
    %c0_i32 = arith.constant 0 : i32
    %c0_i32_0 = arith.constant 0 : i32
    %c0_i32_1 = arith.constant 0 : i32
    return %c0_i32, %c0_i32_0 : i32, i32
  }
  func.func @transform_2(%arg0: i32) -> (i32, i32) {
    %c0_i32 = arith.constant 0 : i32
    %c0_i32_0 = arith.constant 0 : i32
    return %arg0, %c0_i32 : i32, i32
  }
}

</mosaic_0001>

<llo_original>
// kernel: tpu_custom_call.1
$region0: #{tpu_custom_call.1}
  #allocation0 [shape = 'u32[]', space=smem, size = 0x4, offset = 0x4, fixed_abs, tag = 'smem constant byte address 0x4 - core index']
  #allocation1 [shape = 'u32[144,128]{1,0:T(1,128)}', space=vmem, size = 0x12000, scoped, tag = 'internal scratch']
  %s0 = inlined_call_operand.hbm [shape: f32[2,256], index: 0, kind: input, shape index: {}]
  %s1 = inlined_call_operand.hbm [shape: f32[1,256], index: 1, kind: input, shape index: {}]
  %s2 = inlined_call_operand.hbm [shape: f32[2,256], index: 2, kind: output, shape index: {}]
  %s3 = sld [smem:[#allocation0]]
  $region26: #{tpu_custom_call.1} parent=0
    _
  %s5 = ssub.s32 1, %s3
  %s6 = scalar_select 0, %s5, %s3
  $region1: #{tpu_custom_call.1} parent=0
    #allocation2 [shape = 'u8[2048]{0}', space=vmem, size = 0x800, scoped, tag = 'input window, operand 0, single buffered']
    #allocation3 [shape = 's32[1]{0}', space=sflag, size = 0x4, scoped, tag = 'scoped memory for tpu_custom_call.1']
    #allocation4 [shape = 's32[1]{0}', space=sflag, size = 0x4, scoped, tag = 'scoped memory for tpu_custom_call.1']
    #allocation5 [shape = 'u8[1024]{0}', space=vmem, size = 0x400, scoped, tag = 'input window, operand 1, single buffered']
    #allocation6 [shape = 's32[1]{0}', space=sflag, size = 0x4, scoped, tag = 'scoped memory for tpu_custom_call.1']
    #allocation7 [shape = 'u8[2048]{0}', space=vmem, size = 0x800, scoped, tag = 'output window, operand 0, single buffered']
    %7 = vsyncpa [#allocation3], 0
    %8 = vsyncpa [#allocation6], 0
    %9 = vsyncpa [#allocation4], 0
    // Predicated region
    $region2: #{tpu_custom_call.1} parent=1 // pred_check
      _
    $region3: #{tpu_custom_call.1} parent=1 // pred_check_branch
      %11 = sbr.rel (0) target = $region5
    $region4: #{tpu_custom_call.1} parent=1 // pred_region
      %s13 = ssub.s32 64, 64
      %14 = vsyncadd [#allocation3], %s13
      %s16 = sshll.u32 [#allocation2], 4
      %s17 = int_to_ptr.vmem [resolvable:$true] %s16
      %19 = dma.hbm_to_vmem [thread:$0]  %s0, 64, %s17, [#allocation3]
    $region5: #{tpu_custom_call.1} parent=1 // pred_fallthru
      _
    // Predicated region
    $region6: #{tpu_custom_call.1} parent=1 // pred_check
      _
    $region7: #{tpu_custom_call.1} parent=1 // pred_check_branch
      %21 = sbr.rel (0) target = $region9
    $region8: #{tpu_custom_call.1} parent=1 // pred_region
      %s23 = ssub.s32 32, 32
      %24 = vsyncadd [#allocation6], %s23
      %s26 = sshll.u32 [#allocation5], 4
      %s27 = int_to_ptr.vmem [resolvable:$true] %s26
      %29 = dma.hbm_to_vmem [thread:$0]  %s1, 32, %s27, [#allocation6]
    $region9: #{tpu_custom_call.1} parent=1 // pred_fallthru
      _
    // Predicated region
    $region10: #{tpu_custom_call.1} parent=1 // pred_check
      _
    $region11: #{tpu_custom_call.1} parent=1 // pred_check_branch
      %31 = sbr.rel (0) target = $region13
    $region12: #{tpu_custom_call.1} parent=1 // pred_region
      %32 = dma.done [#allocation3], 64
    $region13: #{tpu_custom_call.1} parent=1 // pred_fallthru
      _
    // Predicated region
    $region14: #{tpu_custom_call.1} parent=1 // pred_check
      _
    $region15: #{tpu_custom_call.1} parent=1 // pred_check_branch
      %34 = sbr.rel (0) target = $region17
    $region16: #{tpu_custom_call.1} parent=1 // pred_region
      %35 = dma.done [#allocation6], 32
    $region17: #{tpu_custom_call.1} parent=1 // pred_fallthru
      _
    %v36 = vld [vmem:[#allocation2] sm:$0xf]
    %v37 = vld [vmem:[#allocation5] sm:$0x3]
    %v39 = vlaneseq
    %v40 = vshrl.u32 %v39, 7
    %v41 = vsub.s32 0, %v40
    %v42 = vrot.slane %v37, %v41
    %v43 = vlaneseq
    %v44 = vshrl.u32 %v43, 7
    %v45 = vsub.s32 1, %v44
    %v46 = vrot.slane %v37, %v45
    %v47 = vcombine.low %v42, %v46
    %v49 = vunpack.c.l.s4 1983009808
    %v50 = vunpack.c.0.s8 %v49
    %v51 = vlaneseq
    %v52 = vshrl.u32 %v51, 7
    %v53 = vsub.s32 %v50, %v52
    %v54 = vrot.slane %v47, %v53
    %v56 = vadd.f32 %v36, %v54
    %57 = vst [vmem:[#allocation7] sm:$0xf] %v56
    // Predicated region
    $region18: #{tpu_custom_call.1} parent=1 // pred_check
      _
    $region19: #{tpu_custom_call.1} parent=1 // pred_check_branch
      %59 = sbr.rel (0) target = $region21
    $region20: #{tpu_custom_call.1} parent=1 // pred_region
      %s61 = ssub.s32 64, 64
      %62 = vsyncadd [#allocation4], %s61
      %s64 = sshll.u32 [#allocation7], 4
      %s65 = int_to_ptr.vmem [resolvable:$true] %s64
      %67 = dma.vmem_to_hbm [thread:$0]  %s65, 64, %s2, [#allocation4]
    $region21: #{tpu_custom_call.1} parent=1 // pred_fallthru
      _
    // Predicated region
    $region22: #{tpu_custom_call.1} parent=1 // pred_check
      _
    $region23: #{tpu_custom_call.1} parent=1 // pred_check_branch
      %69 = sbr.rel (0) target = $region25
    $region24: #{tpu_custom_call.1} parent=1 // pred_region
      %70 = dma.done [#allocation4], 64
    $region25: #{tpu_custom_call.1} parent=1 // pred_fallthru
      _
    %71 = vsyncpa [#allocation3], 1
    %72 = vsyncpa [#allocation6], 1
    %73 = vsyncpa [#allocation4], 1

</llo_original>
